<compile_context>
chip_gen: v7x
topology: tpu7x:2x2x1
jax: 0.10.0
libtpu: 0.0.40
codegen_flags: <defaults>
</compile_context>

<pallas_src>
import functools

import jax
import jax.numpy as jnp
from jax.experimental import pallas as pl
from jax.experimental.pallas import tpu as pltpu
import numpy as np


def _round_up(a: int, b: int) -> int:
    return (a + b - 1) // b * b


def _padded_n(n: int, tm: int, tk: int) -> int:
    big, small = max(tm, tk), min(tm, tk)
    if big % small != 0:
        raise ValueError("tm and tk must nest (one divides the other) to keep padding <= max(tm, tk)")
    return _round_up(n, big)


def _vmem_cap_bytes() -> int:
    """Per-generation scoped-VMEM cap with headroom for compiler scratch."""
    try:
        info = pltpu.get_tpu_info()
        phys = int(getattr(info, "vmem_capacity_bytes", 64 << 20))
    except Exception:  # pragma: no cover - conservative fallback (v7x-sized)
        phys = 64 << 20
    return max(phys - (12 << 20), 32 << 20)


def prepare_adjacency(adj, n_pad: int, adj_dtype=jnp.bfloat16):
    """One-time (cacheable) pad + cast of the dense 0/1 adjacency to the streaming dtype.

    Keeping this off the per-call hot path avoids an extra O(N^2) HBM read/write per forward.
    `adj` must have a zero diagonal (self loops are folded in analytically by the kernel).
    """
    n = adj.shape[0]
    if n == n_pad:
        return adj.astype(adj_dtype)
    out = jnp.zeros((n_pad, n_pad), adj_dtype)
    return out.at[:n, :n].set(adj.astype(adj_dtype))


def bgnna_kernel(adj_ref, xw_ref, bias_ref, out_ref, acc_ref, *, cout_idx: int):
    """One (row-tile i, contraction-tile k) step of the fused BGNNA aggregation.

    adj_ref : (tm, tk)        streamed 0/1 adjacency tile (bf16 by default)
    xw_ref  : (n_pad, 2*cpad) VMEM-resident [xw | 1 | xw^2 | 1] operand
    acc_ref : (tm, 2*cpad)    f32 accumulator for adj @ xw_cat
    """
    i = pl.program_id(0)
    k = pl.program_id(1)
    tm, tk = adj_ref.shape
    cpad = acc_ref.shape[1] // 2

    @pl.when(k == 0)
    def _init():
        acc_ref[...] = jnp.zeros_like(acc_ref)

    # Single fused MXU matmul: adj @ [xw | 1 | xw^2 | 1]  (a*a == a for binary adjacency).
    # Cast adjacency to the feature dtype (no-op for the bf16 fast path, upcast for the
    # strict-f32 path); accumulation is always f32.
    a = adj_ref[...].astype(xw_ref.dtype)                              # (tm, tk)
    k_start = pl.multiple_of(k * tk, tk)
    w = xw_ref[pl.ds(k_start, tk), :]                                  # (tk, 2*cpad)
    acc_ref[...] += jnp.dot(a, w, preferred_element_type=jnp.float32)

    @pl.when(k == pl.num_programs(1) - 1)
    def _finalize():
        # Self-loop fold: A = adj + I and A*A = adj + I  (diag(adj) == 0, binary entries),
        # so both halves just add this tile's own rows of xw_cat.
        r_start = pl.multiple_of(i * tm, tm)
        self_rows = xw_ref[pl.ds(r_start, tm), :].astype(jnp.float32)  # (tm, 2*cpad)
        full = acc_ref[...] + self_rows
        s = full[:, :cpad]          # A @ [xw | 1]
        q = full[:, cpad:]          # (A*A) @ [xw^2 | 1]
        pooled = s * s - q          # (tm, cpad), f32 cancellation
        # Column `cout_idx` carried the "ones" feature in both halves, so pooled[:, cout_idx]
        # is exactly rowsum(A)^2 - rowsum(A*A) == the normalization denominator.
        den = pooled[:, cout_idx:cout_idx + 1]                         # (tm, 1)
        norm = jnp.where(den == 0.0, 0.0, pl.reciprocal(den, approx=False))
        out_ref[...] = norm * pooled + bias_ref[...]


def bgnna_forward(x, adj, weight, bias=None, *, tm=512, tk=1024,
                  adj_dtype=jnp.bfloat16, feature_dtype=jnp.bfloat16):
    """BGNNA forward.

    `adj` is the dense 0/1 adjacency WITHOUT self loops (zero diagonal), either raw (n, n)
    or pre-padded via prepare_adjacency(adj, n_pad, adj_dtype) for the cached/hot path.
    feature_dtype=bf16 (default) feeds the MXU at native rate; float32 gives strict parity.
    NOTE: the kernel assumes binary adjacency (a*a == a); weighted graphs need the 2-dot path.
    """
    n, _ = x.shape
    cout = weight.shape[1]
    assert tm % 8 == 0, "row tile must be a multiple of 8 (sublanes)"
    assert tk % 128 == 0, "contraction tile must be a multiple of 128 (lanes)"

    # Lane-dense channel padding; one extra column (index `cout`) holds the "ones" feature.
    cpad = _round_up(cout + 1, 128)
    n_pad = _padded_n(n, tm, tk)
    grid = (n_pad // tm, n_pad // tk)

    if adj.shape == (n_pad, n_pad):
        adj_pad = adj                                  # pre-padded / cached path
    elif adj.shape == (n, n):
        adj_pad = prepare_adjacency(adj, n_pad, adj_dtype)
    else:
        raise ValueError(f"adj must be (n, n)={n, n} or pre-padded (n_pad, n_pad)={n_pad, n_pad}")

    # xw hoisted out of the kernel (O(N*Cin*Cout), tiny vs O(N^2*Cout) aggregation);
    # the square is taken in f32 BEFORE any cast to the feature dtype.
    xw = jnp.dot(x.astype(jnp.float32), weight.astype(jnp.float32),
                 preferred_element_type=jnp.float32)                   # [N, Cout]
    xw_cat = jnp.zeros((n_pad, 2 * cpad), jnp.float32)
    xw_cat = xw_cat.at[:n, :cout].set(xw)
    xw_cat = xw_cat.at[:, cout].set(1.0)                               # rowsum(A) column
    xw_cat = xw_cat.at[:n, cpad:cpad + cout].set(xw * xw)
    xw_cat = xw_cat.at[:, cpad + cout].set(1.0)                        # rowsum(A*A) column
    xw_cat = xw_cat.astype(feature_dtype)

    bias_pad = jnp.zeros((1, cpad), jnp.float32)
    if bias is not None:
        bias_pad = bias_pad.at[0, :cout].set(bias.astype(jnp.float32))

    adj_itemsize = jnp.dtype(adj_pad.dtype).itemsize
    feat_itemsize = jnp.dtype(feature_dtype).itemsize
    vmem_est = (
        2 * tm * tk * adj_itemsize          # adjacency tiles (double-buffered)
        + 2 * n_pad * (2 * cpad) * feat_itemsize  # resident xw_cat (conservative: 2 buffers)
        + 2 * 8 * cpad * 4                  # bias
        + 2 * tm * cpad * 4                 # output tile
        + tm * (2 * cpad) * 4               # f32 accumulator scratch
    )
    vmem_limit = int(min(max(int(1.25 * vmem_est) + (4 << 20), 32 << 20), _vmem_cap_bytes()))

    out_pad = pl.pallas_call(
        functools.partial(bgnna_kernel, cout_idx=cout),
        out_shape=jax.ShapeDtypeStruct((n_pad, cpad), jnp.float32),
        grid_spec=pltpu.PrefetchScalarGridSpec(
            num_scalar_prefetch=0,
            grid=grid,
            in_specs=[
                pl.BlockSpec((tm, tk), lambda i, k: (i, k)),            # adjacency, streamed
                pl.BlockSpec((n_pad, 2 * cpad), lambda i, k: (0, 0)),   # xw_cat, VMEM-resident
                pl.BlockSpec((1, cpad), lambda i, k: (0, 0)),           # bias, resident
            ],
            out_specs=pl.BlockSpec((tm, cpad), lambda i, k: (i, 0)),
            scratch_shapes=[
                pltpu.VMEM((tm, 2 * cpad), jnp.float32),                # fused accumulator
            ],
        ),
        compiler_params=pltpu.CompilerParams(
            dimension_semantics=("parallel", "arbitrary"),
            vmem_limit_bytes=vmem_limit,
        ),
    )(adj_pad, xw_cat, bias_pad)

    return out_pad[:n, :cout]


def bgnna_reference(x, adj, weight, bias):
    """Pure-JAX reference mirroring the PyTorch forward."""
    n = adj.shape[0]
    a = adj + jnp.eye(n, dtype=adj.dtype)
    xw = x @ weight
    s = a @ xw
    pooled = s * s - (a * a) @ (xw * xw)
    den = jnp.square(a.sum(-1)) - jnp.square(a).sum(-1)
    norm = jnp.where(den == 0.0, 0.0, 1.0 / den)
    return norm[:, None] * pooled + bias[None, :]


if __name__ == "__main__":
    key = jax.random.PRNGKey(0)
    k_x, k_adj, k_w, k_b = jax.random.split(key, 4)

    # Small synthetic graph sized so the grid exercises both row tiling and contraction
    # accumulation: N=200, tm=64, tk=128 -> n_pad=256, grid=(4, 2).
    N, C_IN, C_OUT = 200, 8, 32
    TM, TK = 64, 128

    x = jax.random.normal(k_x, (N, C_IN), dtype=jnp.float32)

    # Dense 0/1 adjacency (what edge_index.to_dense() yields), symmetric, zero diagonal.
    adj_raw = (jax.random.uniform(k_adj, (N, N)) < 0.1).astype(jnp.float32)
    adj = jnp.maximum(adj_raw, adj_raw.T) * (1.0 - jnp.eye(N, dtype=jnp.float32))

    bound = float(np.sqrt(6.0 / (C_IN + C_OUT)))   # xavier-uniform
    weight = jax.random.uniform(k_w, (C_IN, C_OUT), minval=-bound, maxval=bound,
                                dtype=jnp.float32)
    bias = 0.1 * jax.random.normal(k_b, (C_OUT,), dtype=jnp.float32)

    ref = bgnna_reference(x, adj, weight, bias)

    # Cached/hot path: pad + cast the adjacency once, reuse across forward calls.
    n_pad = _padded_n(N, TM, TK)
    adj_prepared = prepare_adjacency(adj, n_pad, jnp.bfloat16)

    # Fast path: bf16 MXU operands (0/1 adjacency and ones columns stay exact; xw features
    # see bf16 rounding, so compare with a bf16-appropriate tolerance).
    out_fast = bgnna_forward(x, adj_prepared, weight, bias, tm=TM, tk=TK,
                             feature_dtype=jnp.bfloat16)
    out_fast = jax.block_until_ready(out_fast)
    np.testing.assert_allclose(np.asarray(out_fast), np.asarray(ref), rtol=3e-2, atol=3e-3)

    # Strict-f32 path: exact parity with the f32 reference.
    out_exact = bgnna_forward(x, adj_prepared, weight, bias, tm=TM, tk=TK,
                              feature_dtype=jnp.float32)
    out_exact = jax.block_until_ready(out_exact)
    np.testing.assert_allclose(np.asarray(out_exact), np.asarray(ref), rtol=2e-5, atol=2e-5)

    print("KERNEL_OK")
</pallas_src>

<mosaic_0001>
module attributes {stable_mosaic.version = 11 : i64} {
  func.func @bgnna_kernel(%arg0: i32, %arg1: i32, %arg2: memref<64x128xbf16, #tpu.memory_space<vmem>>, %arg3: memref<256x256xbf16, #tpu.memory_space<vmem>>, %arg4: memref<1x128xf32, #tpu.memory_space<vmem>>, %arg5: memref<64x128xf32, #tpu.memory_space<vmem>>, %arg6: memref<64x256xf32, #tpu.memory_space<vmem>>) attributes {dimension_semantics = [#tpu.dimension_semantics<parallel>, #tpu.dimension_semantics<arbitrary>], iteration_bounds = array<i64: 4, 2>, scalar_prefetch = 0 : i64, scratch_operands = 1 : i64, tpu.core_type = #tpu.core_type<tc>, window_params = [{transform_indices = @transform_0, window_bounds = array<i64: 64, 128>}, {pipeline_mode = #tpu.pipeline_mode<synchronous>, transform_indices = @transform_1, window_bounds = array<i64: 256, 256>}, {pipeline_mode = #tpu.pipeline_mode<synchronous>, transform_indices = @transform_2, window_bounds = array<i64: 1, 128>}, {transform_indices = @transform_3, window_bounds = array<i64: 64, 128>}]} {
    %c0_i32 = arith.constant 0 : i32
    %0 = arith.cmpi eq, %arg1, %c0_i32 : i32
    %1 = arith.extui %0 : i1 to i32
    %c0_i32_0 = arith.constant 0 : i32
    %2 = arith.cmpi ne, %1, %c0_i32_0 : i32
    scf.if %2 {
      %cst_8 = arith.constant 0.000000e+00 : f32
      %15 = vector.broadcast %cst_8 : f32 to vector<64x256xf32>
      %c0_9 = arith.constant 0 : index
      %c0_10 = arith.constant 0 : index
      %16 = vector.load %arg6[%c0_9, %c0_10] : memref<64x256xf32, #tpu.memory_space<vmem>>, vector<64x256xf32>
      tpu.vector_store %arg6[%c0_9, %c0_10], %15 {strides = array<i32>} : memref<64x256xf32, #tpu.memory_space<vmem>>, vector<64x256xf32>,
    } else {
    }
    %c0 = arith.constant 0 : index
    %c0_1 = arith.constant 0 : index
    %3 = vector.load %arg2[%c0, %c0_1] : memref<64x128xbf16, #tpu.memory_space<vmem>>, vector<64x128xbf16>
    %c128_i32 = arith.constant 128 : i32
    %4 = arith.muli %arg1, %c128_i32 : i32
    %5 = tpu.assume_multiple %4, 128 : i32
    %6 = arith.index_cast %5 : i32 to index
    %c0_2 = arith.constant 0 : index
    %7 = vector.load %arg3[%6, %c0_2] : memref<256x256xbf16, #tpu.memory_space<vmem>>, vector<128x256xbf16>
    %c0_3 = arith.constant 0 : index
    %c0_4 = arith.constant 0 : index
    %8 = vector.load %arg6[%c0_3, %c0_4] : memref<64x256xf32, #tpu.memory_space<vmem>>, vector<64x256xf32>
    %cst = arith.constant dense<0.000000e+00> : vector<64x256xf32>
    %9 = tpu.matmul %3, %7, %cst {dimension_numbers = #tpu.dot_dimension_numbers<[1], [0], [0], [1], [0, 0, 1, 1], [], []>} : vector<64x128xbf16>, vector<128x256xbf16>, vector<64x256xf32> -> vector<64x256xf32>
    %10 = arith.addf %8, %9 : vector<64x256xf32>
    %c0_5 = arith.constant 0 : index
    %c0_6 = arith.constant 0 : index
    %11 = vector.load %arg6[%c0_5, %c0_6] : memref<64x256xf32, #tpu.memory_space<vmem>>, vector<64x256xf32>
    tpu.vector_store %arg6[%c0_5, %c0_6], %10 {strides = array<i32>} : memref<64x256xf32, #tpu.memory_space<vmem>>, vector<64x256xf32>,
    %c1_i32 = arith.constant 1 : i32
    %12 = arith.cmpi eq, %arg1, %c1_i32 : i32
    %13 = arith.extui %12 : i1 to i32
    %c0_i32_7 = arith.constant 0 : i32
    %14 = arith.cmpi ne, %13, %c0_i32_7 : i32
    scf.if %14 {
      %c64_i32 = arith.constant 64 : i32
      %15 = arith.muli %arg0, %c64_i32 : i32
      %16 = tpu.assume_multiple %15, 64 : i32
      %17 = arith.index_cast %16 : i32 to index
      %c0_8 = arith.constant 0 : index
      %18 = vector.load %arg3[%17, %c0_8] : memref<256x256xbf16, #tpu.memory_space<vmem>>, vector<64x256xbf16>
      %19 = arith.extf %18 : vector<64x256xbf16> to vector<64x256xf32>
      %c0_9 = arith.constant 0 : index
      %c0_10 = arith.constant 0 : index
      %20 = vector.load %arg6[%c0_9, %c0_10] : memref<64x256xf32, #tpu.memory_space<vmem>>, vector<64x256xf32>
      %21 = arith.addf %20, %19 : vector<64x256xf32>
      %22 = vector.extract_strided_slice %21 {offsets = [0, 0], sizes = [64, 128], strides = [1, 1]} : vector<64x256xf32> to vector<64x128xf32>
      %23 = vector.extract_strided_slice %21 {offsets = [0, 128], sizes = [64, 128], strides = [1, 1]} : vector<64x256xf32> to vector<64x128xf32>
      %24 = arith.mulf %22, %22 : vector<64x128xf32>
      %25 = arith.subf %24, %23 : vector<64x128xf32>
      %26 = vector.extract_strided_slice %25 {offsets = [0, 32], sizes = [64, 1], strides = [1, 1]} : vector<64x128xf32> to vector<64x1xf32>
      %cst_11 = arith.constant 0.000000e+00 : f32
      %27 = vector.broadcast %cst_11 : f32 to vector<64x1xf32>
      %28 = arith.cmpf oeq, %26, %27 : vector<64x1xf32>
      %29 = tpu.reciprocal %26 : vector<64x1xf32> -> vector<64x1xf32>
      %cst_12 = arith.constant 0.000000e+00 : f32
      %30 = vector.broadcast %cst_12 : f32 to vector<64x1xf32>
      %31 = arith.select %28, %30, %29 : vector<64x1xi1>, vector<64x1xf32>
      %32 = vector.broadcast %31 : vector<64x1xf32> to vector<64x128xf32>
      %33 = arith.mulf %32, %25 : vector<64x128xf32>
      %c0_13 = arith.constant 0 : index
      %c0_14 = arith.constant 0 : index
      %34 = vector.load %arg4[%c0_13, %c0_14] : memref<1x128xf32, #tpu.memory_space<vmem>>, vector<1x128xf32>
      %35 = vector.broadcast %34 : vector<1x128xf32> to vector<64x128xf32>
      %36 = arith.addf %33, %35 : vector<64x128xf32>
      %c0_15 = arith.constant 0 : index
      %c0_16 = arith.constant 0 : index
      %37 = vector.load %arg5[%c0_15, %c0_16] : memref<64x128xf32, #tpu.memory_space<vmem>>, vector<64x128xf32>
      tpu.vector_store %arg5[%c0_15, %c0_16], %36 {strides = array<i32>} : memref<64x128xf32, #tpu.memory_space<vmem>>, vector<64x128xf32>,
    } else {
    }
    return
  }
  func.func @transform_0(%arg0: i32, %arg1: i32) -> (i32, i32) {
    %c0_i32 = arith.constant 0 : i32
    return %arg0, %arg1 : i32, i32
  }
  func.func @transform_1(%arg0: i32, %arg1: i32) -> (i32, i32) {
    %c0_i32 = arith.constant 0 : i32
    %c0_i32_0 = arith.constant 0 : i32
    %c0_i32_1 = arith.constant 0 : i32
    return %c0_i32, %c0_i32_0 : i32, i32
  }
  func.func @transform_2(%arg0: i32, %arg1: i32) -> (i32, i32) {
    %c0_i32 = arith.constant 0 : i32
    %c0_i32_0 = arith.constant 0 : i32
    %c0_i32_1 = arith.constant 0 : i32
    return %c0_i32, %c0_i32_0 : i32, i32
  }
  func.func @transform_3(%arg0: i32, %arg1: i32) -> (i32, i32) {
    %c0_i32 = arith.constant 0 : i32
    %c0_i32_0 = arith.constant 0 : i32
    return %arg0, %c0_i32 : i32, i32
  }
}

</mosaic_0001>

<llo_original>
// kernel: tpu_custom_call.1
$region0: #{tpu_custom_call.1}
  #allocation0 [shape = 'u32[]', space=smem, size = 0x4, offset = 0x4, fixed_abs, tag = 'smem constant byte address 0x4 - core index']
  #allocation1 [shape = 'u32[144,128]{1,0:T(1,128)}', space=vmem, size = 0x12000, scoped, tag = 'internal scratch']
  #allocation2 [shape = 'f32[64,256]{1,0:T(8,128)}', space=vmem, size = 0x10000, scoped, tag = 'scratch operand']
  %s0 = inlined_call_operand.hbm [shape: bf16[256,256], index: 0, kind: input, shape index: {}]
  %s1 = inlined_call_operand.hbm [shape: bf16[256,256], index: 1, kind: input, shape index: {}]
  %s2 = inlined_call_operand.vmem [shape: f32[1,128], index: 2, kind: input, shape index: {}]
  %s3 = inlined_call_operand.hbm [shape: f32[256,128], index: 3, kind: output, shape index: {}]
  %s4 = sld [smem:[#allocation0]]
  $region61: #{tpu_custom_call.1} parent=0
    _
  %s6 = ssub.s32 1, %s4
  %s7 = scalar_select 0, %s6, %s4
  $region1: #{tpu_custom_call.1} parent=0
    #allocation3 [shape = 'u8[32768]{0}', space=vmem, size = 0x8000, scoped, tag = 'input window, operand 0']
    #allocation4 [shape = 's32[2]{0}', space=sflag, size = 0x8, scoped, tag = 'scoped memory for tpu_custom_call.1']
    #allocation5 [shape = 's32[2]{0}', space=sflag, size = 0x8, scoped, tag = 'scoped memory for tpu_custom_call.1']
    #allocation6 [shape = 'u8[131072]{0}', space=vmem, size = 0x20000, scoped, tag = 'input window, operand 1, single buffered']
    #allocation7 [shape = 's32[1]{0}', space=sflag, size = 0x4, scoped, tag = 'scoped memory for tpu_custom_call.1']
    #allocation8 [shape = 'u8[65536]{0}', space=vmem, size = 0x10000, scoped, tag = 'output window, operand 0']
    %8 = vsyncpa [#allocation4], 0
    %s9 = scalar_lea.sflag [#allocation4], 1
    %10 = vsyncpa %s9, 0
    %11 = vsyncpa [#allocation7], 0
    %12 = vsyncpa [#allocation5], 0
    %s13 = scalar_lea.sflag [#allocation5], 1
    %14 = vsyncpa %s13, 0
    loop: start=0, step=1, limit=10
    $region2: #{tpu_custom_call.1} parent=1 // loop_pre_header
      _
    $region3: #{tpu_custom_call.1} parent=1 // loop_header
      %s16 = sphi 0, %s20
      %p17 = scmp.ge.s32.totalorder %s16, 10
      %s23 = sphi 0, %s35
      %s24 = sphi 0, %s31
      %s25 = sphi 0, %s23
      %s26 = sphi 0, %s24
      %s27 = sphi 0, %s25
      %s28 = sphi 0, %s26
      %s40 = sphi 0, %s42
      %s43 = sphi 0, %s40
      %s44 = sphi 0, %s43
      %s60 = sphi 0, %s44
      %s64 = sphi 0, %s64
      %s66 = sphi 0, %s64
      %s67 = sphi 0, %s66
      %s81 = sphi 0, %s67
      %s85 = sphi 0, %s85
      %s87 = sphi 0, %s85
      %s88 = sphi 0, %s87
      %s102 = sphi 0, %s88
      %s108 = sphi 0, %s110
      %s111 = sphi 0, %s108
      %s112 = sphi 0, %s111
      %s128 = sphi 0, %s112
    $region4: #{tpu_custom_call.1} parent=1 // loop_header_branch
      %19 = sbr.rel (%p17) target = $region8
    $region5: #{tpu_custom_call.1} parent=1 // loop_body
      %s21 = ssub.s32 %s16, 1
      %s22 = ssub.s32 %s16, 2
      %s29 = sadd.s32 1, %s24
      %p30 = scmp.ge.s32.totalorder %s29, 2
      %s31 = scalar_select %p30, 0, %s29
      %s32 = sadd.s32 1, %s23
      %s33 = scalar_select %p30, %s32, %s23
      %p34 = scmp.ge.s32.totalorder %s33, 4
      %s35 = scalar_select %p34, 0, %s33
      %s36 = ssub.s32 %s23, %s35
      %s37 = ssub.s32 %s24, %s31
      %s38 = sor.u32 %s36, %s37
      %p39 = scmp.eq.s32.totalorder %s38, 0
      %s41 = sadd.s32 %s40, 1
      %s42 = scalar_select %p39, %s40, %s41
      %p45 = pneg %p39
      %p46 = scmp.eq.s32.totalorder %s16, 7
      %p47 = por %p45, %p46
      %p48 = scmp.ne.s32.totalorder %s40, %s43
      %p49 = scmp.eq.s32.totalorder %s16, 0
      %p50 = por %p48, %p49
      %p51 = scmp.ne.s32.totalorder %s40, %s43
      %p52 = scmp.eq.s32.totalorder %s21, 7
      %p53 = por %p51, %p52
      %p54 = scmp.ne.s32.totalorder %s43, %s44
      %p55 = scmp.eq.s32.totalorder %s21, 0
      %p56 = por %p54, %p55
      %p57 = scmp.ne.s32.totalorder %s43, %s44
      %p58 = scmp.eq.s32.totalorder %s22, 7
      %p59 = por %p57, %p58
      %p61 = scmp.ne.s32.totalorder %s44, %s60
      %p62 = scmp.eq.s32.totalorder %s22, 0
      %p63 = por %p61, %p62
      %s65 = sadd.s32 %s64, 1
      %p68 = scmp.eq.s32.totalorder %s16, 7
      %p69 = scmp.ne.s32.totalorder %s64, %s66
      %p70 = scmp.eq.s32.totalorder %s16, 0
      %p71 = por %p69, %p70
      %p72 = scmp.ne.s32.totalorder %s64, %s66
      %p73 = scmp.eq.s32.totalorder %s21, 7
      %p74 = por %p72, %p73
      %p75 = scmp.ne.s32.totalorder %s66, %s67
      %p76 = scmp.eq.s32.totalorder %s21, 0
      %p77 = por %p75, %p76
      %p78 = scmp.ne.s32.totalorder %s66, %s67
      %p79 = scmp.eq.s32.totalorder %s22, 7
      %p80 = por %p78, %p79
      %p82 = scmp.ne.s32.totalorder %s67, %s81
      %p83 = scmp.eq.s32.totalorder %s22, 0
      %p84 = por %p82, %p83
      %s86 = sadd.s32 %s85, 1
      %p89 = scmp.eq.s32.totalorder %s16, 7
      %p90 = scmp.ne.s32.totalorder %s85, %s87
      %p91 = scmp.eq.s32.totalorder %s16, 0
      %p92 = por %p90, %p91
      %p93 = scmp.ne.s32.totalorder %s85, %s87
      %p94 = scmp.eq.s32.totalorder %s21, 7
      %p95 = por %p93, %p94
      %p96 = scmp.ne.s32.totalorder %s87, %s88
      %p97 = scmp.eq.s32.totalorder %s21, 0
      %p98 = por %p96, %p97
      %p99 = scmp.ne.s32.totalorder %s87, %s88
      %p100 = scmp.eq.s32.totalorder %s22, 7
      %p101 = por %p99, %p100
      %p103 = scmp.ne.s32.totalorder %s88, %s102
      %p104 = scmp.eq.s32.totalorder %s22, 0
      %p105 = por %p103, %p104
      %s106 = ssub.s32 %s23, %s35
      %p107 = scmp.eq.s32.totalorder %s106, 0
      %s109 = sadd.s32 %s108, 1
      %s110 = scalar_select %p107, %s108, %s109
      %p113 = pneg %p107
      %p114 = scmp.eq.s32.totalorder %s16, 7
      %p115 = por %p113, %p114
      %p116 = scmp.ne.s32.totalorder %s108, %s111
      %p117 = scmp.eq.s32.totalorder %s16, 0
      %p118 = por %p116, %p117
      %p119 = scmp.ne.s32.totalorder %s108, %s111
      %p120 = scmp.eq.s32.totalorder %s21, 7
      %p121 = por %p119, %p120
      %p122 = scmp.ne.s32.totalorder %s111, %s112
      %p123 = scmp.eq.s32.totalorder %s21, 0
      %p124 = por %p122, %p123
      %p125 = scmp.ne.s32.totalorder %s111, %s112
      %p126 = scmp.eq.s32.totalorder %s22, 7
      %p127 = por %p125, %p126
      %p129 = scmp.ne.s32.totalorder %s112, %s128
      %p130 = scmp.eq.s32.totalorder %s22, 0
      %p131 = por %p129, %p130
      %p132 = scmp.le.s32.totalorder 1, %s16
      %p133 = scmp.lt.s32.totalorder %s16, 9
      %p134 = pnand %p132, %p133
      %p135 = pneg %p134
      // Predicated region
      $region9: #{tpu_custom_call.1} parent=5 // pred_check
        _
      $region10: #{tpu_custom_call.1} parent=5 // pred_check_branch
        %137 = sbr.rel (%p134) target = $region12
      $region11: #{tpu_custom_call.1} parent=5 // pred_region
        %s138 = ssub.s32 %s16, 1
        // Predicated region
        $region13: #{tpu_custom_call.1} parent=11 // pred_check
          %p139 = pneg %p77
        $region14: #{tpu_custom_call.1} parent=11 // pred_check_branch
          %141 = sbr.rel (%p139) target = $region16
        $region15: #{tpu_custom_call.1} parent=11 // pred_region
          %s143 = ssub.s32 4096, 4096
          %144 = vsyncadd [#allocation7], %s143
          %s145 = sshll.u32 [#allocation6], 4
          %s146 = int_to_ptr.vmem [resolvable:$true] %s145
          %151 = dma.hbm_to_vmem [thread:$0]  %s1, 4096, %s146, [#allocation7], 128, 128, 8
        $region16: #{tpu_custom_call.1} parent=11 // pred_fallthru
          _
        // Predicated region
        $region17: #{tpu_custom_call.1} parent=11 // pred_check
          %p152 = pneg %p98
        $region18: #{tpu_custom_call.1} parent=11 // pred_check_branch
          %154 = sbr.rel (%p152) target = $region20
        $region19: #{tpu_custom_call.1} parent=11 // pred_region
          _
        $region20: #{tpu_custom_call.1} parent=11 // pred_fallthru
          _
      $region12: #{tpu_custom_call.1} parent=5 // pred_fallthru
        _
      %p155 = scmp.lt.s32.totalorder %s16, 8
      // Predicated region
      $region21: #{tpu_custom_call.1} parent=5 // pred_check
        %p156 = pneg %p155
      $region22: #{tpu_custom_call.1} parent=5 // pred_check_branch
        %158 = sbr.rel (%p156) target = $region24
      $region23: #{tpu_custom_call.1} parent=5 // pred_region
        // Predicated region
        $region25: #{tpu_custom_call.1} parent=23 // pred_check
          %p159 = pneg %p50
        $region26: #{tpu_custom_call.1} parent=23 // pred_check_branch
          %161 = sbr.rel (%p159) target = $region28
        $region27: #{tpu_custom_call.1} parent=23 // pred_region
          %s162 = sand.u32 %s40, 1
          %s163 = scalar_lea.sflag [#allocation4], %s162
          %s164 = sand.u32 %s40, 1
          %s165 = smul.addr %s164, 32
          %s166 = scalar_lea.vmem [#allocation3], %s165
          %s167 = smul.u32 8, %s23
          %s169 = ssub.s32 512, 512
          %170 = vsyncadd %s163, %s169
          %s171 = smul.addr %s167, 2
          %s172 = sadd.s32 %s24, %s171
          %s173 = smul.addr %s172, 64
          %s174 = scalar_lea.hbm %s0, %s173
          %s175 = sshll.u32 %s166, 4
          %s176 = int_to_ptr.vmem [resolvable:$true] %s175
          %181 = dma.hbm_to_vmem [thread:$0]  %s174, 512, %s176, %s163, 128, 64, 4
        $region28: #{tpu_custom_call.1} parent=23 // pred_fallthru
          _
      $region24: #{tpu_custom_call.1} parent=5 // pred_fallthru
        _
      %p182 = scmp.le.s32.totalorder 1, %s16
      %p183 = scmp.lt.s32.totalorder %s16, 9
      %p184 = pnand %p182, %p183
      %p185 = pneg %p184
      // Predicated region
      $region29: #{tpu_custom_call.1} parent=5 // pred_check
        _
      $region30: #{tpu_custom_call.1} parent=5 // pred_check_branch
        %187 = sbr.rel (%p184) target = $region32
      $region31: #{tpu_custom_call.1} parent=5 // pred_region
        %s188 = ssub.s32 %s16, 1
        %s189 = sand.u32 %s43, 1
        %s190 = scalar_lea.sflag [#allocation4], %s189
        %s191 = sand.u32 %s43, 1
        %s192 = smul.addr %s191, 32
        %s193 = scalar_lea.vmem [#allocation3], %s192
        // Predicated region
        $region33: #{tpu_custom_call.1} parent=31 // pred_check
          %p194 = pneg %p56
        $region34: #{tpu_custom_call.1} parent=31 // pred_check_branch
          %196 = sbr.rel (%p194) target = $region36
        $region35: #{tpu_custom_call.1} parent=31 // pred_region
          %197 = dma.done %s190, 512
        $region36: #{tpu_custom_call.1} parent=31 // pred_fallthru
          _
        // Predicated region
        $region37: #{tpu_custom_call.1} parent=31 // pred_check
          %p198 = pneg %p77
        $region38: #{tpu_custom_call.1} parent=31 // pred_check_branch
          %200 = sbr.rel (%p198) target = $region40
        $region39: #{tpu_custom_call.1} parent=31 // pred_region
          %201 = dma.done [#allocation7], 4096
        $region40: #{tpu_custom_call.1} parent=31 // pred_fallthru
          _
        %s202 = sand.u32 %s43, 1
        %s203 = scalar_lea.sflag [#allocation4], %s202
        %s204 = sand.u32 %s43, 1
        %s205 = smul.addr %s204, 32
        %s206 = scalar_lea.vmem [#allocation3], %s205
        %p207 = pneg %p56
        %p208 = pneg %p53
        %p209 = pneg %p77
        %p210 = pneg %p74
        %p211 = pneg %p98
        %p212 = pneg %p95
        %p213 = pneg %p124
        %p214 = pneg %p121
        %s215 = sand.u32 %s111, 1
        %s216 = scalar_lea.sflag [#allocation5], %s215
        %s217 = sand.u32 %s111, 1
        %s218 = smul.addr %s217, 64
        %s219 = scalar_lea.vmem [#allocation8], %s218
        %s220 = smul.u32 8, %s25
        %s221 = smul.u32 8, %s25
        %p223 = scmp.eq.s32.totalorder %s26, 0
        // Predicated region
        $region41: #{tpu_custom_call.1} parent=31 // pred_check
          %p224 = pneg %p223
        $region42: #{tpu_custom_call.1} parent=31 // pred_check_branch
          %226 = sbr.rel (%p224) target = $region44
        $region43: #{tpu_custom_call.1} parent=31 // pred_region
          %227 = vst [vmem:[#allocation2] sm:$0xff] 0.0
          %228 = vst [vmem:[#allocation2 + $0x8] sm:$0xff] 0.0
          %229 = vst [vmem:[#allocation2 + $0x10] sm:$0xff] 0.0
          %230 = vst [vmem:[#allocation2 + $0x18] sm:$0xff] 0.0
          %231 = vst [vmem:[#allocation2 + $0x20] sm:$0xff] 0.0
          %232 = vst [vmem:[#allocation2 + $0x28] sm:$0xff] 0.0
          %233 = vst [vmem:[#allocation2 + $0x30] sm:$0xff] 0.0
          %234 = vst [vmem:[#allocation2 + $0x38] sm:$0xff] 0.0
          %235 = vst [vmem:[#allocation2 + $0x40] sm:$0xff] 0.0
          %236 = vst [vmem:[#allocation2 + $0x48] sm:$0xff] 0.0
          %237 = vst [vmem:[#allocation2 + $0x50] sm:$0xff] 0.0
          %238 = vst [vmem:[#allocation2 + $0x58] sm:$0xff] 0.0
          %239 = vst [vmem:[#allocation2 + $0x60] sm:$0xff] 0.0
          %240 = vst [vmem:[#allocation2 + $0x68] sm:$0xff] 0.0
          %241 = vst [vmem:[#allocation2 + $0x70] sm:$0xff] 0.0
          %242 = vst [vmem:[#allocation2 + $0x78] sm:$0xff] 0.0
        $region44: #{tpu_custom_call.1} parent=31 // pred_fallthru
          _
        %v243 = vld [vmem:[%s193] sm:$0xf]
        %v244 = vld [vmem:[%s193 + $0x4] sm:$0xf]
        %v245 = vld [vmem:[%s193 + $0x8] sm:$0xf]
        %v246 = vld [vmem:[%s193 + $0xc] sm:$0xf]
        %v247 = vld [vmem:[%s193 + $0x10] sm:$0xf]
        %v248 = vld [vmem:[%s193 + $0x14] sm:$0xf]
        %v249 = vld [vmem:[%s193 + $0x18] sm:$0xf]
        %v250 = vld [vmem:[%s193 + $0x1c] sm:$0xf]
        %s251 = smul.u32 %s26, 128
        %s252 = sshra.s32 %s251, 3
        %s253 = sand.u32 %s251, 7
        %s254 = smul.u32 %s252, 2
        %s255 = smul.addr %s254, 4
        %s256 = scalar_lea.vmem [#allocation6], %s255
        %v257 = vld [vmem:[%s256] sm:$0xff]
        %v258 = vld [vmem:[%s256 + $0x8] sm:$0xff]
        %v259 = vld [vmem:[%s256 + $0x10] sm:$0xff]
        %v260 = vld [vmem:[%s256 + $0x18] sm:$0xff]
        %v261 = vld [vmem:[%s256 + $0x20] sm:$0xff]
        %v262 = vld [vmem:[%s256 + $0x28] sm:$0xff]
        %v263 = vld [vmem:[%s256 + $0x30] sm:$0xff]
        %v264 = vld [vmem:[%s256 + $0x38] sm:$0xff]
        %v265 = vld [vmem:[%s256 + $0x40] sm:$0xff]
        %v266 = vld [vmem:[%s256 + $0x48] sm:$0xff]
        %v267 = vld [vmem:[%s256 + $0x50] sm:$0xff]
        %v268 = vld [vmem:[%s256 + $0x58] sm:$0xff]
        %v269 = vld [vmem:[%s256 + $0x60] sm:$0xff]
        %v270 = vld [vmem:[%s256 + $0x68] sm:$0xff]
        %v271 = vld [vmem:[%s256 + $0x70] sm:$0xff]
        %v272 = vld [vmem:[%s256 + $0x78] sm:$0xff]
        %v273 = vld [vmem:[#allocation2] sm:$0xff]
        %v274 = vld [vmem:[#allocation2 + $0x8] sm:$0xff]
        %v275 = vld [vmem:[#allocation2 + $0x10] sm:$0xff]
        %v276 = vld [vmem:[#allocation2 + $0x18] sm:$0xff]
        %v277 = vld [vmem:[#allocation2 + $0x20] sm:$0xff]
        %v278 = vld [vmem:[#allocation2 + $0x28] sm:$0xff]
        %v279 = vld [vmem:[#allocation2 + $0x30] sm:$0xff]
        %v280 = vld [vmem:[#allocation2 + $0x38] sm:$0xff]
        %v281 = vld [vmem:[#allocation2 + $0x40] sm:$0xff]
        %v282 = vld [vmem:[#allocation2 + $0x48] sm:$0xff]
        %v283 = vld [vmem:[#allocation2 + $0x50] sm:$0xff]
        %v284 = vld [vmem:[#allocation2 + $0x58] sm:$0xff]
        %v285 = vld [vmem:[#allocation2 + $0x60] sm:$0xff]
        %v286 = vld [vmem:[#allocation2 + $0x68] sm:$0xff]
        %v287 = vld [vmem:[#allocation2 + $0x70] sm:$0xff]
        %v288 = vld [vmem:[#allocation2 + $0x78] sm:$0xff]
        %v297 = vunpack.c.l.b16 %v243
        %v298 = vunpack.c.l.b16 %v244
        %v299 = vunpack.c.l.b16 %v245
        %v300 = vunpack.c.l.b16 %v246
        %v301 = vunpack.c.l.b16 %v247
        %v302 = vunpack.c.l.b16 %v248
        %v303 = vunpack.c.l.b16 %v249
        %v304 = vunpack.c.l.b16 %v250
        %v305 = vpack.c.b16 %v298, %v297
        %v306 = vpack.c.b16 %v300, %v299
        %v307 = vpack.c.b16 %v302, %v301
        %v308 = vpack.c.b16 %v304, %v303
        %v329 = vunpack.c.l.b16 %v257
        %v330 = vunpack.c.h.b16 %v257
        %v331 = vunpack.c.l.b16 %v258
        %v332 = vunpack.c.h.b16 %v258
        %v333 = vunpack.c.l.b16 %v259
        %v334 = vunpack.c.h.b16 %v259
        %v335 = vunpack.c.l.b16 %v260
        %v336 = vunpack.c.h.b16 %v260
        %v337 = vunpack.c.l.b16 %v261
        %v338 = vunpack.c.h.b16 %v261
        %v339 = vunpack.c.l.b16 %v262
        %v340 = vunpack.c.h.b16 %v262
        %v341 = vunpack.c.l.b16 %v263
        %v342 = vunpack.c.h.b16 %v263
        %v343 = vunpack.c.l.b16 %v264
        %v344 = vunpack.c.h.b16 %v264
        %v345 = vunpack.c.l.b16 %v265
        %v346 = vunpack.c.h.b16 %v265
        %v347 = vunpack.c.l.b16 %v266
        %v348 = vunpack.c.h.b16 %v266
        %v349 = vunpack.c.l.b16 %v267
        %v350 = vunpack.c.h.b16 %v267
        %v351 = vunpack.c.l.b16 %v268
        %v352 = vunpack.c.h.b16 %v268
        %v353 = vunpack.c.l.b16 %v269
        %v354 = vunpack.c.h.b16 %v269
        %v355 = vunpack.c.l.b16 %v270
        %v356 = vunpack.c.h.b16 %v270
        %v357 = vunpack.c.l.b16 %v271
        %v358 = vunpack.c.h.b16 %v271
        %v359 = vunpack.c.l.b16 %v272
        %v360 = vunpack.c.h.b16 %v272
        %v361 = vpack.c.b16 %v331, %v329
        %v362 = vpack.c.b16 %v332, %v330
        %v363 = vpack.c.b16 %v335, %v333
        %v364 = vpack.c.b16 %v336, %v334
        %v365 = vpack.c.b16 %v339, %v337
        %v366 = vpack.c.b16 %v340, %v338
        %v367 = vpack.c.b16 %v343, %v341
        %v368 = vpack.c.b16 %v344, %v342
        %v369 = vpack.c.b16 %v347, %v345
        %v370 = vpack.c.b16 %v348, %v346
        %v371 = vpack.c.b16 %v351, %v349
        %v372 = vpack.c.b16 %v352, %v350
        %v373 = vpack.c.b16 %v355, %v353
        %v374 = vpack.c.b16 %v356, %v354
        %v375 = vpack.c.b16 %v359, %v357
        %v376 = vpack.c.b16 %v360, %v358
        %393 = vmatprep.subr.bf16.mxu0 %v362
        %394 = vmatpush1.bf16.msra.mxu0 %v361
        %395 = vmatprep.subr.bf16.mxu0 %v364
        %396 = vmatpush1.bf16.msra.mxu0 %v363
        %397 = vmatprep.subr.bf16.mxu0 %v366
        %398 = vmatpush1.bf16.msra.mxu0 %v365
        %399 = vmatprep.subr.bf16.mxu0 %v368
        %400 = vmatpush1.bf16.msra.mxu0 %v367
        %401 = vmatprep.subr.bf16.mxu0 %v370
        %402 = vmatpush1.bf16.msra.mxu0 %v369
        %403 = vmatprep.subr.bf16.mxu0 %v372
        %404 = vmatpush1.bf16.msra.mxu0 %v371
        %405 = vmatprep.subr.bf16.mxu0 %v374
        %406 = vmatpush1.bf16.msra.mxu0 %v373
        %407 = vmatprep.subr.bf16.mxu0 %v376
        %408 = vmatpush1.bf16.msra.mxu0 %v375
        %409 = vmatprep.subr.bf16.mxu0 0
        %410 = vmatpush1.bf16.msra.mxu0 0
        %411 = vmatprep.subr.bf16.mxu0 0
        %412 = vmatpush1.bf16.msra.mxu0 0
        %413 = vmatprep.subr.bf16.mxu0 0
        %414 = vmatpush1.bf16.msra.mxu0 0
        %415 = vmatprep.subr.bf16.mxu0 0
        %416 = vmatpush1.bf16.msra.mxu0 0
        %417 = vmatprep.subr.bf16.mxu0 0
        %418 = vmatpush1.bf16.msra.mxu0 0
        %419 = vmatprep.subr.bf16.mxu0 0
        %420 = vmatpush1.bf16.msra.mxu0 0
        %421 = vmatprep.subr.bf16.mxu0 0
        %422 = vmatpush1.bf16.msra.mxu0 0
        %423 = vmatprep.subr.bf16.mxu0 0
        %424 = vmatpush1.bf16.msra.mxu0 0
        %425 = vmatprep.mubr.bf16.mxu0 0
        %426 = vmatmul.mubr.bf16.gmra.mrb[0].mxu0 %v305
        %v427 = vpop.f32.mrb[0].mxu0
        %v428 = vadd.f32 0.0, %v427
        %v429 = vpop.f32.mrb[0].mxu0
        %v430 = vadd.f32 0.0, %v429
        %v431 = vpop.f32.mrb[0].mxu0
        %v432 = vadd.f32 0.0, %v431
        %v433 = vpop.f32.mrb[0].mxu0
        %v434 = vadd.f32 0.0, %v433
        %435 = vmatprep.mubr.bf16.mxu0 0
        %436 = vmatmul.mubr.bf16.gmra.mrb[0].mxu0 %v306
        %v437 = vpop.f32.mrb[0].mxu0
        %v438 = vadd.f32 0.0, %v437
        %v439 = vpop.f32.mrb[0].mxu0
        %v440 = vadd.f32 0.0, %v439
        %v441 = vpop.f32.mrb[0].mxu0
        %v442 = vadd.f32 0.0, %v441
        %v443 = vpop.f32.mrb[0].mxu0
        %v444 = vadd.f32 0.0, %v443
        %445 = vmatprep.mubr.bf16.mxu0 0
        %446 = vmatmul.mubr.bf16.gmra.mrb[0].mxu0 %v307
        %v447 = vpop.f32.mrb[0].mxu0
        %v448 = vadd.f32 0.0, %v447
        %v449 = vpop.f32.mrb[0].mxu0
        %v450 = vadd.f32 0.0, %v449
        %v451 = vpop.f32.mrb[0].mxu0
        %v452 = vadd.f32 0.0, %v451
        %v453 = vpop.f32.mrb[0].mxu0
        %v454 = vadd.f32 0.0, %v453
        %455 = vmatprep.mubr.bf16.mxu0 0
        %456 = vmatmul.mubr.bf16.gmra.mrb[0].mxu0 %v308
        %v457 = vpop.f32.mrb[0].mxu0
        %v458 = vadd.f32 0.0, %v457
        %v459 = vpop.f32.mrb[0].mxu0
        %v460 = vadd.f32 0.0, %v459
        %v461 = vpop.f32.mrb[0].mxu0
        %v462 = vadd.f32 0.0, %v461
        %v463 = vpop.f32.mrb[0].mxu0
        %v464 = vadd.f32 0.0, %v463
        %465 = vdwg.mxu0
        %v466 = vadd.f32 %v273, %v428
        %v467 = vadd.f32 %v274, %v430
        %v468 = vadd.f32 %v275, %v432
        %v469 = vadd.f32 %v276, %v434
        %v470 = vadd.f32 %v277, %v438
        %v471 = vadd.f32 %v278, %v440
        %v472 = vadd.f32 %v279, %v442
        %v473 = vadd.f32 %v280, %v444
        %v474 = vadd.f32 %v281, %v448
        %v475 = vadd.f32 %v282, %v450
        %v476 = vadd.f32 %v283, %v452
        %v477 = vadd.f32 %v284, %v454
        %v478 = vadd.f32 %v285, %v458
        %v479 = vadd.f32 %v286, %v460
        %v480 = vadd.f32 %v287, %v462
        %v481 = vadd.f32 %v288, %v464
        %482 = vst [vmem:[#allocation2] sm:$0xff] %v466
        %483 = vst [vmem:[#allocation2 + $0x8] sm:$0xff] %v467
        %484 = vst [vmem:[#allocation2 + $0x10] sm:$0xff] %v468
        %485 = vst [vmem:[#allocation2 + $0x18] sm:$0xff] %v469
        %486 = vst [vmem:[#allocation2 + $0x20] sm:$0xff] %v470
        %487 = vst [vmem:[#allocation2 + $0x28] sm:$0xff] %v471
        %488 = vst [vmem:[#allocation2 + $0x30] sm:$0xff] %v472
        %489 = vst [vmem:[#allocation2 + $0x38] sm:$0xff] %v473
        %490 = vst [vmem:[#allocation2 + $0x40] sm:$0xff] %v474
        %491 = vst [vmem:[#allocation2 + $0x48] sm:$0xff] %v475
        %492 = vst [vmem:[#allocation2 + $0x50] sm:$0xff] %v476
        %493 = vst [vmem:[#allocation2 + $0x58] sm:$0xff] %v477
        %494 = vst [vmem:[#allocation2 + $0x60] sm:$0xff] %v478
        %495 = vst [vmem:[#allocation2 + $0x68] sm:$0xff] %v479
        %496 = vst [vmem:[#allocation2 + $0x70] sm:$0xff] %v480
        %497 = vst [vmem:[#allocation2 + $0x78] sm:$0xff] %v481
        %p498 = scmp.eq.s32.totalorder %s26, 1
        // Predicated region
        $region45: #{tpu_custom_call.1} parent=31 // pred_check
          %p499 = pneg %p498
        $region46: #{tpu_custom_call.1} parent=31 // pred_check_branch
          %501 = sbr.rel (%p499) target = $region48
        $region47: #{tpu_custom_call.1} parent=31 // pred_region
          %s502 = smul.u32 %s25, 64
          %s503 = sshra.s32 %s502, 3
          %s504 = sand.u32 %s502, 7
          %s505 = smul.u32 %s503, 2
          %s506 = smul.addr %s505, 4
          %s507 = scalar_lea.vmem [#allocation6], %s506
          %v508 = vld [vmem:[%s507] sm:$0xff]
          %v509 = vld [vmem:[%s507 + $0x8] sm:$0xff]
          %v510 = vld [vmem:[%s507 + $0x10] sm:$0xff]
          %v511 = vld [vmem:[%s507 + $0x18] sm:$0xff]
          %v512 = vld [vmem:[%s507 + $0x20] sm:$0xff]
          %v513 = vld [vmem:[%s507 + $0x28] sm:$0xff]
          %v514 = vld [vmem:[%s507 + $0x30] sm:$0xff]
          %v515 = vld [vmem:[%s507 + $0x38] sm:$0xff]
          %v516 = vunpack.c.l.bf16 %v508
          %v517 = vunpack.c.h.bf16 %v508
          %v518 = vunpack.c.l.bf16 %v509
          %v519 = vunpack.c.h.bf16 %v509
          %v520 = vunpack.c.l.bf16 %v510
          %v521 = vunpack.c.h.bf16 %v510
          %v522 = vunpack.c.l.bf16 %v511
          %v523 = vunpack.c.h.bf16 %v511
          %v524 = vunpack.c.l.bf16 %v512
          %v525 = vunpack.c.h.bf16 %v512
          %v526 = vunpack.c.l.bf16 %v513
          %v527 = vunpack.c.h.bf16 %v513
          %v528 = vunpack.c.l.bf16 %v514
          %v529 = vunpack.c.h.bf16 %v514
          %v530 = vunpack.c.l.bf16 %v515
          %v531 = vunpack.c.h.bf16 %v515
          %v532 = vld [vmem:[#allocation2] sm:$0xff]
          %v533 = vld [vmem:[#allocation2 + $0x8] sm:$0xff]
          %v534 = vld [vmem:[#allocation2 + $0x10] sm:$0xff]
          %v535 = vld [vmem:[#allocation2 + $0x18] sm:$0xff]
          %v536 = vld [vmem:[#allocation2 + $0x20] sm:$0xff]
          %v537 = vld [vmem:[#allocation2 + $0x28] sm:$0xff]
          %v538 = vld [vmem:[#allocation2 + $0x30] sm:$0xff]
          %v539 = vld [vmem:[#allocation2 + $0x38] sm:$0xff]
          %v540 = vld [vmem:[#allocation2 + $0x40] sm:$0xff]
          %v541 = vld [vmem:[#allocation2 + $0x48] sm:$0xff]
          %v542 = vld [vmem:[#allocation2 + $0x50] sm:$0xff]
          %v543 = vld [vmem:[#allocation2 + $0x58] sm:$0xff]
          %v544 = vld [vmem:[#allocation2 + $0x60] sm:$0xff]
          %v545 = vld [vmem:[#allocation2 + $0x68] sm:$0xff]
          %v546 = vld [vmem:[#allocation2 + $0x70] sm:$0xff]
          %v547 = vld [vmem:[#allocation2 + $0x78] sm:$0xff]
          %v548 = vadd.f32 %v532, %v516
          %v549 = vadd.f32 %v533, %v517
          %v550 = vadd.f32 %v534, %v518
          %v551 = vadd.f32 %v535, %v519
          %v552 = vadd.f32 %v536, %v520
          %v553 = vadd.f32 %v537, %v521
          %v554 = vadd.f32 %v538, %v522
          %v555 = vadd.f32 %v539, %v523
          %v556 = vadd.f32 %v540, %v524
          %v557 = vadd.f32 %v541, %v525
          %v558 = vadd.f32 %v542, %v526
          %v559 = vadd.f32 %v543, %v527
          %v560 = vadd.f32 %v544, %v528
          %v561 = vadd.f32 %v545, %v529
          %v562 = vadd.f32 %v546, %v530
          %v563 = vadd.f32 %v547, %v531
          %v564 = vmul.f32 %v548, %v548
          %v565 = vmul.f32 %v550, %v550
          %v566 = vmul.f32 %v552, %v552
          %v567 = vmul.f32 %v554, %v554
          %v568 = vmul.f32 %v556, %v556
          %v569 = vmul.f32 %v558, %v558
          %v570 = vmul.f32 %v560, %v560
          %v571 = vmul.f32 %v562, %v562
          %v572 = vsub.f32 %v564, %v549
          %v573 = vsub.f32 %v565, %v551
          %v574 = vsub.f32 %v566, %v553
          %v575 = vsub.f32 %v567, %v555
          %v576 = vsub.f32 %v568, %v557
          %v577 = vsub.f32 %v569, %v559
          %v578 = vsub.f32 %v570, %v561
          %v579 = vsub.f32 %v571, %v563
          %vm580 = vcmp.eq.f32.partialorder %v572, 0.0
          %vm581 = vcmp.eq.f32.partialorder %v573, 0.0
          %vm582 = vcmp.eq.f32.partialorder %v574, 0.0
          %vm583 = vcmp.eq.f32.partialorder %v575, 0.0
          %vm584 = vcmp.eq.f32.partialorder %v576, 0.0
          %vm585 = vcmp.eq.f32.partialorder %v577, 0.0
          %vm586 = vcmp.eq.f32.partialorder %v578, 0.0
          %vm587 = vcmp.eq.f32.partialorder %v579, 0.0
          %v588 = vrcp.pop %v572
          %v589 = vrcp.pop %v573
          %v590 = vrcp.pop %v574
          %v591 = vrcp.pop %v575
          %v592 = vrcp.pop %v576
          %v593 = vrcp.pop %v577
          %v594 = vrcp.pop %v578
          %v595 = vrcp.pop %v579
          %v596 = vsel %vm580, 0.0, %v588
          %v597 = vsel %vm581, 0.0, %v589
          %v598 = vsel %vm582, 0.0, %v590
          %v599 = vsel %vm583, 0.0, %v591
          %v600 = vsel %vm584, 0.0, %v592
          %v601 = vsel %vm585, 0.0, %v593
          %v602 = vsel %vm586, 0.0, %v594
          %v603 = vsel %vm587, 0.0, %v595
          %605 = vset.pattern.permute.xlu0 32
          %606 = vperm.xlu0 %605, %v596
          %v607 = vpop.permute.xlu0 %606
          %610 = vset.pattern.permute.xlu0 32
          %611 = vperm.xlu0 %610, %v597
          %v612 = vpop.permute.xlu0 %611
          %615 = vset.pattern.permute.xlu0 32
          %616 = vperm.xlu0 %615, %v598
          %v617 = vpop.permute.xlu0 %616
          %620 = vset.pattern.permute.xlu0 32
          %621 = vperm.xlu0 %620, %v599
          %v622 = vpop.permute.xlu0 %621
          %625 = vset.pattern.permute.xlu0 32
          %626 = vperm.xlu0 %625, %v600
          %v627 = vpop.permute.xlu0 %626
          %630 = vset.pattern.permute.xlu0 32
          %631 = vperm.xlu0 %630, %v601
          %v632 = vpop.permute.xlu0 %631
          %635 = vset.pattern.permute.xlu0 32
          %636 = vperm.xlu0 %635, %v602
          %v637 = vpop.permute.xlu0 %636
          %640 = vset.pattern.permute.xlu0 32
          %641 = vperm.xlu0 %640, %v603
          %v642 = vpop.permute.xlu0 %641
          %v644 = vmul.f32 %v607, %v572
          %v645 = vmul.f32 %v612, %v573
          %v646 = vmul.f32 %v617, %v574
          %v647 = vmul.f32 %v622, %v575
          %v648 = vmul.f32 %v627, %v576
          %v649 = vmul.f32 %v632, %v577
          %v650 = vmul.f32 %v637, %v578
          %v651 = vmul.f32 %v642, %v579
          %v652 = vld [vmem:[%s2] sm:$0x1]
          %v654 = vlaneseq
          %v655 = vshrl.u32 %v654, 7
          %v656 = vsub.s32 0, %v655
          %v657 = vrot.slane %v652, %v656
          %v659 = vadd.f32 %v644, %v657
          %v660 = vadd.f32 %v645, %v657
          %v661 = vadd.f32 %v646, %v657
          %v662 = vadd.f32 %v647, %v657
          %v663 = vadd.f32 %v648, %v657
          %v664 = vadd.f32 %v649, %v657
          %v665 = vadd.f32 %v650, %v657
          %v666 = vadd.f32 %v651, %v657
          %667 = vst [vmem:[%s219] sm:$0xff] %v659
          %668 = vst [vmem:[%s219 + $0x8] sm:$0xff] %v660
          %669 = vst [vmem:[%s219 + $0x10] sm:$0xff] %v661
          %670 = vst [vmem:[%s219 + $0x18] sm:$0xff] %v662
          %671 = vst [vmem:[%s219 + $0x20] sm:$0xff] %v663
          %672 = vst [vmem:[%s219 + $0x28] sm:$0xff] %v664
          %673 = vst [vmem:[%s219 + $0x30] sm:$0xff] %v665
          %674 = vst [vmem:[%s219 + $0x38] sm:$0xff] %v666
        $region48: #{tpu_custom_call.1} parent=31 // pred_fallthru
          _
        %s675 = sand.u32 %s111, 1
        %s676 = scalar_lea.sflag [#allocation5], %s675
        %s677 = sand.u32 %s111, 1
        %s678 = smul.addr %s677, 64
        %s679 = scalar_lea.vmem [#allocation8], %s678
        // Predicated region
        $region49: #{tpu_custom_call.1} parent=31 // pred_check
          %p680 = pneg %p121
        $region50: #{tpu_custom_call.1} parent=31 // pred_check_branch
          %682 = sbr.rel (%p680) target = $region52
        $region51: #{tpu_custom_call.1} parent=31 // pred_region
          %s683 = smul.u32 8, %s25
          %s685 = ssub.s32 1024, 1024
          %686 = vsyncadd %s676, %s685
          %s687 = smul.addr %s683, 128
          %s688 = scalar_lea.hbm %s3, %s687
          %s689 = sshll.u32 %s679, 4
          %s690 = int_to_ptr.vmem [resolvable:$true] %s689
          %695 = dma.vmem_to_hbm [thread:$0]  %s690, 1024, %s688, %s676, 128, 128, 8
        $region52: #{tpu_custom_call.1} parent=31 // pred_fallthru
          _
      $region32: #{tpu_custom_call.1} parent=5 // pred_fallthru
        _
      %p696 = scmp.le.s32.totalorder 2, %s16
      // Predicated region
      $region53: #{tpu_custom_call.1} parent=5 // pred_check
        %p697 = pneg %p696
      $region54: #{tpu_custom_call.1} parent=5 // pred_check_branch
        %699 = sbr.rel (%p697) target = $region56
      $region55: #{tpu_custom_call.1} parent=5 // pred_region
        %s700 = ssub.s32 %s16, 2
        // Predicated region
        $region57: #{tpu_custom_call.1} parent=55 // pred_check
          %p701 = pneg %p127
        $region58: #{tpu_custom_call.1} parent=55 // pred_check_branch
          %703 = sbr.rel (%p701) target = $region60
        $region59: #{tpu_custom_call.1} parent=55 // pred_region
          %s704 = sand.u32 %s112, 1
          %s705 = scalar_lea.sflag [#allocation5], %s704
          %s706 = sand.u32 %s112, 1
          %s707 = smul.addr %s706, 64
          %s708 = scalar_lea.vmem [#allocation8], %s707
          %709 = dma.done %s705, 1024
        $region60: #{tpu_custom_call.1} parent=55 // pred_fallthru
          _
      $region56: #{tpu_custom_call.1} parent=5 // pred_fallthru
        _
    $region6: #{tpu_custom_call.1} parent=1 // loop_footer
      %s20 = sadd.s32 1, %s16
    $region7: #{tpu_custom_call.1} parent=1 // loop_footer_branch
      %15 = sbr.rel target = $region3
    $region8: #{tpu_custom_call.1} parent=1 // loop_exit
      _
    %710 = vsyncpa [#allocation4], 1
    %s711 = scalar_lea.sflag [#allocation4], 1
    %712 = vsyncpa %s711, 1
    %713 = vsyncpa [#allocation7], 1
    %714 = vsyncpa [#allocation5], 1
    %s715 = scalar_lea.sflag [#allocation5], 1
    %716 = vsyncpa %s715, 1

</llo_original>
